<compile_context>
chip_gen: v6e
topology: v6e:2x2x1
jax: 0.10.0
libtpu: 0.0.40
codegen_flags: <defaults>
</compile_context>

<pallas_src>
import functools

import jax
import jax.numpy as jnp
from jax.experimental import pallas as pl
from jax.experimental.pallas import tpu as pltpu

EPS = 1e-5                      # PyTorch BatchNorm default eps

# Scoped-VMEM budget: ~60% of physical VMEM (v5e/v6e 128 MiB -> ~76 MiB,
# v7x 64 MiB -> ~38 MiB); safe fallback when the query is unavailable.
try:
    _VMEM_CAP = int(getattr(pltpu.get_tpu_info(), "vmem_capacity_bytes",
                            64 * 1024 * 1024))
except Exception:  # pragma: no cover - non-TPU tracing environments
    _VMEM_CAP = 64 * 1024 * 1024
_VMEM_LIMIT = min((_VMEM_CAP * 3) // 5, 96 * 1024 * 1024)
_BLOCK_BYTES = 2 << 20          # ~2 MiB activation row-blocks


def _make_divisible(v, divisor=8, min_value=None):
    if min_value is None:
        min_value = divisor
    new_v = max(min_value, int(v + divisor / 2) // divisor * divisor)
    if new_v < 0.9 * v:
        new_v += divisor
    return int(new_v)


def _relu6(x):
    return jnp.minimum(jnp.maximum(x, 0.0), 6.0)


def _hswish(x):
    return x * (_relu6(x + 3.0) / 6.0)


def _nonlinear(x, use_relu6):
    return _relu6(x) if use_relu6 else _hswish(x)


def _row_tile(n_rows, n_ch, target_bytes=_BLOCK_BYTES):
    """Largest row-block that divides n_rows, is a multiple of 8 and stays
    under ~target_bytes of f32 at n_ch channels."""
    want = min(n_rows, max(8, target_bytes // max(1, 4 * n_ch)))
    want = max(8, (want // 8) * 8)
    for cand in range(want, 7, -8):
        if n_rows % cand == 0:
            return cand
    # TODO(synk): masked/padded last tile (pl.cdiv grid) for awkward
    # production row counts; this fallback is only hit at small test shapes.
    return n_rows


def _band_height(H):
    """Row-band height for the depthwise vreg accumulation (divides H)."""
    for cand in (8, 16):
        if H % cand == 0:
            return cand
    return H


def _cparams(*sem):
    return pltpu.CompilerParams(dimension_semantics=sem,
                                vmem_limit_bytes=_VMEM_LIMIT)


def _full(shape):
    zeros = (0,) * len(shape)
    return pl.BlockSpec(shape, lambda *args: zeros)


def _colsum_stats(v):
    """Per-channel [sum; sum of squares] of a (rows, C) slab -> (2, C)."""
    s1 = jnp.sum(v, axis=0, keepdims=True)
    s2 = jnp.sum(v * v, axis=0, keepdims=True)
    return jnp.concatenate([s1, s2], axis=0)


# ------------------------------ Pallas kernels ------------------------------

def _expand_kernel(x_ref, w_ref, y_ref, st_ref, *, mm_dtype):
    # x: (R, Cin) row tile, w: (Cin, E) -> y: (R, E) raw (pre-BN) expansion,
    # st: (1, 2, E) partial BN1 statistics for this tile (from the f32 acc).
    y = jnp.dot(x_ref[...].astype(mm_dtype), w_ref[...].astype(mm_dtype),
                preferred_element_type=jnp.float32)
    y_ref[...] = y.astype(y_ref.dtype)
    st_ref[0] = _colsum_stats(y)


def _dwconv_kernel(y1_ref, sc_ref, sh_ref, wd_ref, z_ref, st_ref, xpad, wsh,
                   *, k, H, W, E, bh, use_relu6):
    # y1: (1, H, W, E) raw expansion; sc/sh: (1, E) BN1 affine; wd: (k*k, E).
    # z:  (1, H, W, E) raw depthwise output; st: (1, 2, E) partial BN2 stats.
    # xpad: (H+2p, W+2p, E) halo scratch; wsh: (k, H+2p, W, E) W-shifted slabs.
    p = k // 2
    f32 = jnp.float32
    y = _nonlinear(y1_ref[0].astype(f32) * sc_ref[...] + sh_ref[...], use_relu6)
    # Halo built on-chip: interior written once, only the thin frame is zeroed.
    xpad[p:p + H, p:p + W, :] = y
    if p:
        xpad[:p, :, :] = jnp.zeros((p, W + 2 * p, E), f32)
        xpad[p + H:, :, :] = jnp.zeros((p, W + 2 * p, E), f32)
        xpad[:, :p, :] = jnp.zeros((H + 2 * p, p, E), f32)
        xpad[:, p + W:, :] = jnp.zeros((H + 2 * p, p, E), f32)
    # Pay the sublane (W-axis) realignment k times instead of k*k: build the k
    # W-shifted slabs once; the per-tap H offset below is a free address
    # offset on the leading axis.
    for dw in range(k):
        wsh[dw] = xpad[:, dw:dw + W, :]
    wd = wd_ref[...].astype(f32)                                   # (k*k, E)
    st_ref[...] = jnp.zeros_like(st_ref)

    nbands = H // bh

    @pl.loop(0, nbands, unroll=nbands <= 8)
    def _band(b):
        r0 = b * bh
        # k*k taps accumulated in vregs; the output band is stored exactly
        # once and the BN2 partials are folded into the same pass.
        acc = wd[0][None, None, :] * wsh[0, pl.ds(r0, bh), :, :]
        for tap in range(1, k * k):
            dh, dw = divmod(tap, k)
            acc += wd[tap][None, None, :] * wsh[dw, pl.ds(r0 + dh, bh), :, :]
        z_ref[0, pl.ds(r0, bh), :, :] = acc.astype(z_ref.dtype)
        st_ref[0, 0, :] += jnp.sum(acc, axis=(0, 1))
        st_ref[0, 1, :] += jnp.sum(acc * acc, axis=(0, 1))


def _se_project_kernel(z2_ref, sc_ref, sh_ref, w1_ref, b1_ref, w2_ref, b2_ref,
                       w3_ref, z3_ref, st_ref, *, H, W, use_relu6, mm_dtype):
    # SE fused with projection: one image's z2 is read exactly once, the
    # expanded activation y2 never touches HBM.
    f32 = jnp.float32
    y = _nonlinear(z2_ref[0].astype(f32) * sc_ref[...] + sh_ref[...], use_relu6)
    y2d = y.reshape(H * W, -1)
    pooled = jnp.mean(y2d, axis=0, keepdims=True)                     # (1, E)
    h = jnp.dot(pooled, w1_ref[...], preferred_element_type=f32)
    h = jnp.maximum(h + b1_ref[...], 0.0)                             # ReLU
    g = jnp.dot(h, w2_ref[...], preferred_element_type=f32)
    gate = _hswish(g + b2_ref[...])                                   # (1, E)
    z = jnp.dot((y2d * gate).astype(mm_dtype), w3_ref[...].astype(mm_dtype),
                preferred_element_type=f32)                           # (HW, o)
    z3_ref[0] = z.astype(z3_ref.dtype)
    st_ref[0] = _colsum_stats(z)


def _project_kernel(z2_ref, sc_ref, sh_ref, w_ref, z3_ref, st_ref,
                    *, use_relu6, mm_dtype):
    # Non-SE path: row-tiled BN2 + nl + 1x1 project + BN3 partials.
    y = _nonlinear(z2_ref[...].astype(jnp.float32) * sc_ref[...] + sh_ref[...],
                   use_relu6)
    z = jnp.dot(y.astype(mm_dtype), w_ref[...].astype(mm_dtype),
                preferred_element_type=jnp.float32)
    z3_ref[...] = z.astype(z3_ref.dtype)
    st_ref[0] = _colsum_stats(z)


def _bn_residual_kernel(*refs, shortcut):
    # z3: (R, C) raw projection (possibly lane-folded); sc/sh: (1, C) BN3
    # affine (lane-periodic when folded); [x: (R, C) shortcut].
    if shortcut:
        z3_ref, sc_ref, sh_ref, x_ref, o_ref = refs
    else:
        z3_ref, sc_ref, sh_ref, o_ref = refs
    z = z3_ref[...].astype(jnp.float32) * sc_ref[...] + sh_ref[...]
    if shortcut:
        z = z + x_ref[...]
    o_ref[...] = z


# ------------------------------- JAX wrapper --------------------------------

def _bn_scale_shift(partial_stats, count, gamma, beta):
    """Fold per-tile [sum, sumsq] partials into per-channel scale/shift."""
    s = jnp.sum(partial_stats.reshape(-1, 2, partial_stats.shape[-1]), axis=0)
    mean = s[0] / count
    var = jnp.maximum(s[1] / count - mean * mean, 0.0)
    # TODO(synk): centered two-pass variance would be more robust at extreme scales.
    scale = gamma * jax.lax.rsqrt(var + EPS)
    shift = beta - mean * scale
    return scale.reshape(1, -1), shift.reshape(1, -1)


def prepare_params(params, mm_dtype=jnp.bfloat16):
    """One-time weight preprocessing (transposes/casts hoisted off the hot path)."""
    f32 = jnp.float32
    E, k, _ = params["wd"].shape
    row = lambda v: v.reshape(1, -1).astype(f32)
    return {
        "_prepared": True,
        "mm_dtype": mm_dtype,
        "w1t": params["w1"].T.astype(mm_dtype),                     # (Cin, E)
        "w3t": params["w3"].T.astype(mm_dtype),                     # (E, o)
        "wd_taps": jnp.transpose(params["wd"], (1, 2, 0)).reshape(k * k, E)
                     .astype(f32),                                  # (k*k, E)
        "wse1t": params["wse1"].T.astype(f32), "bse1": row(params["bse1"]),
        "wse2t": params["wse2"].T.astype(f32), "bse2": row(params["bse2"]),
        "g1": params["g1"].astype(f32), "be1": params["be1"].astype(f32),
        "g2": params["g2"].astype(f32), "be2": params["be2"].astype(f32),
        "g3": params["g3"].astype(f32), "be3": params["be3"].astype(f32),
    }


def inverted_residual_block_pallas(x, params, *, i, t, o, k, s, re=False,
                                   se=False, mm_dtype=jnp.bfloat16,
                                   store_dtype=jnp.bfloat16):
    """x: (N, Cin, H, W) float32 (PyTorch NCHW).
    mm_dtype: MXU operand dtype for the 1x1 convs (bf16 recommended on all of
    v5e/v6e/v7x); store_dtype: HBM dtype for the raw intermediates (BN stats
    are always computed from the f32 accumulators before the cast)."""
    assert s == 1, "only stride 1 is implemented"
    # TODO(synk): stride > 1 in the depthwise stage (strided window gather).
    N, Cin, H, W = x.shape
    assert Cin == i
    E = int(i * t)
    Hse = _make_divisible(E // 4)
    HW, NHW = H * W, N * H * W
    shortcut = (i == o) and (s == 1)
    f32 = jnp.float32

    pp = params if isinstance(params, dict) and params.get("_prepared") \
        else prepare_params(params, mm_dtype=mm_dtype)
    mm_dtype = pp["mm_dtype"]

    # One transpose of the smallest tensor (the input); all expanded
    # intermediates stay channels-last and are only reshaped between stages.
    # TODO(synk): fuse the boundary NCHW<->NHWC transposes into the first/last kernels.
    x = x.astype(f32)
    x2d = jnp.transpose(x, (0, 2, 3, 1)).reshape(NHW, Cin)

    # ---- stage 1: 1x1 expand (raw) + partial BN1 stats ----------------------
    tr1 = _row_tile(NHW, max(Cin, E))
    g1 = NHW // tr1
    y1raw, st1 = pl.pallas_call(
        functools.partial(_expand_kernel, mm_dtype=mm_dtype),
        out_shape=(jax.ShapeDtypeStruct((NHW, E), store_dtype),
                   jax.ShapeDtypeStruct((g1, 2, E), f32)),
        grid=(g1,),
        in_specs=[pl.BlockSpec((tr1, Cin), lambda j: (j, 0)),
                  _full((Cin, E))],
        out_specs=(pl.BlockSpec((tr1, E), lambda j: (j, 0)),
                   pl.BlockSpec((1, 2, E), lambda j: (j, 0, 0))),
        compiler_params=_cparams("parallel"),
    )(x2d, pp["w1t"])
    sc1, sh1 = _bn_scale_shift(st1, NHW, pp["g1"], pp["be1"])

    # ---- stage 2: BN1 + nl + depthwise kxk + partial BN2 stats (per image) --
    # TODO(synk): row-band (H +/- halo) tiling instead of whole images for
    # production MobileNetV3 shapes on v7x (64 MiB VMEM) and deeper pipelining.
    p = k // 2
    bh = _band_height(H)
    z2, st2 = pl.pallas_call(
        functools.partial(_dwconv_kernel, k=k, H=H, W=W, E=E, bh=bh,
                          use_relu6=re),
        out_shape=(jax.ShapeDtypeStruct((N, H, W, E), store_dtype),
                   jax.ShapeDtypeStruct((N, 2, E), f32)),
        grid=(N,),
        in_specs=[pl.BlockSpec((1, H, W, E), lambda n: (n, 0, 0, 0)),
                  _full((1, E)), _full((1, E)), _full((k * k, E))],
        out_specs=(pl.BlockSpec((1, H, W, E), lambda n: (n, 0, 0, 0)),
                   pl.BlockSpec((1, 2, E), lambda n: (n, 0, 0))),
        scratch_shapes=[pltpu.VMEM((H + 2 * p, W + 2 * p, E), f32),
                        pltpu.VMEM((k, H + 2 * p, W, E), f32)],
        compiler_params=_cparams("parallel"),
    )(y1raw.reshape(N, H, W, E), sc1, sh1, pp["wd_taps"])
    sc2, sh2 = _bn_scale_shift(st2, NHW, pp["g2"], pp["be2"])

    # ---- stage 3: BN2 + nl (+ fused SE) + 1x1 project + partial BN3 stats ---
    if se:
        z3raw, st3 = pl.pallas_call(
            functools.partial(_se_project_kernel, H=H, W=W, use_relu6=re,
                              mm_dtype=mm_dtype),
            out_shape=(jax.ShapeDtypeStruct((N, HW, o), store_dtype),
                       jax.ShapeDtypeStruct((N, 2, o), f32)),
            grid=(N,),
            in_specs=[pl.BlockSpec((1, H, W, E), lambda n: (n, 0, 0, 0)),
                      _full((1, E)), _full((1, E)),
                      _full((E, Hse)), _full((1, Hse)),
                      _full((Hse, E)), _full((1, E)),
                      _full((E, o))],
            out_specs=(pl.BlockSpec((1, HW, o), lambda n: (n, 0, 0)),
                       pl.BlockSpec((1, 2, o), lambda n: (n, 0, 0))),
            compiler_params=_cparams("parallel"),
        )(z2, sc2, sh2, pp["wse1t"], pp["bse1"], pp["wse2t"], pp["bse2"],
          pp["w3t"])
    else:
        tr3 = _row_tile(NHW, max(E, o))
        g3 = NHW // tr3
        z3raw, st3 = pl.pallas_call(
            functools.partial(_project_kernel, use_relu6=re, mm_dtype=mm_dtype),
            out_shape=(jax.ShapeDtypeStruct((NHW, o), store_dtype),
                       jax.ShapeDtypeStruct((g3, 2, o), f32)),
            grid=(g3,),
            in_specs=[pl.BlockSpec((tr3, E), lambda j: (j, 0)),
                      _full((1, E)), _full((1, E)), _full((E, o))],
            out_specs=(pl.BlockSpec((tr3, o), lambda j: (j, 0)),
                       pl.BlockSpec((1, 2, o), lambda j: (j, 0, 0))),
            compiler_params=_cparams("parallel"),
        )(z2.reshape(NHW, E), sc2, sh2, pp["w3t"])
    sc3, sh3 = _bn_scale_shift(st3, NHW, pp["g3"], pp["be3"])

    # ---- BN3 affine (+ residual), lane-dense when channels are small --------
    z3_flat = z3raw.reshape(NHW, o)
    lane_fold = (o < 128) and (128 % o == 0) and ((NHW * o) % (8 * 128) == 0)
    if lane_fold:
        rows4, cols4, rep = NHW * o // 128, 128, 128 // o
        z3v = z3_flat.reshape(rows4, cols4)
        sc3v, sh3v = jnp.tile(sc3, (1, rep)), jnp.tile(sh3, (1, rep))
        xres = x2d.reshape(rows4, cols4) if shortcut else None
    else:
        rows4, cols4 = NHW, o
        z3v, sc3v, sh3v = z3_flat, sc3, sh3
        xres = x2d if shortcut else None

    tr4 = _row_tile(rows4, cols4)
    g4 = rows4 // tr4
    in_specs = [pl.BlockSpec((tr4, cols4), lambda j: (j, 0)),
                _full((1, cols4)), _full((1, cols4))]
    operands = [z3v, sc3v, sh3v]
    if shortcut:
        in_specs.append(pl.BlockSpec((tr4, cols4), lambda j: (j, 0)))
        operands.append(xres)
    out2d = pl.pallas_call(
        functools.partial(_bn_residual_kernel, shortcut=shortcut),
        out_shape=jax.ShapeDtypeStruct((rows4, cols4), f32),
        grid=(g4,),
        in_specs=in_specs,
        out_specs=pl.BlockSpec((tr4, cols4), lambda j: (j, 0)),
        compiler_params=_cparams("parallel"),
    )(*operands)

    return jnp.transpose(out2d.reshape(N, H, W, o), (0, 3, 1, 2))     # -> NCHW


# ----------------------- deterministic parameter init -----------------------

def init_params(key, i, t, o, k):
    E = int(i * t)
    Hse = _make_divisible(E // 4)
    ks = jax.random.split(key, 16)
    n = lambda kk, shape, scale=0.2: scale * jax.random.normal(kk, shape, jnp.float32)
    return {
        "w1": n(ks[0], (E, i)), "b1": n(ks[1], (E,)),
        "g1": 1.0 + n(ks[2], (E,), 0.1), "be1": n(ks[3], (E,), 0.1),
        "wd": n(ks[4], (E, k, k)), "bd": n(ks[5], (E,)),
        "g2": 1.0 + n(ks[6], (E,), 0.1), "be2": n(ks[7], (E,), 0.1),
        "wse1": n(ks[8], (Hse, E)), "bse1": n(ks[9], (Hse,)),
        "wse2": n(ks[10], (E, Hse)), "bse2": n(ks[11], (E,)),
        "w3": n(ks[12], (o, E)), "b3": n(ks[13], (o,)),
        "g3": 1.0 + n(ks[14], (o,), 0.1), "be3": n(ks[15], (o,), 0.1),
    }


# ------------------------------ pure-JAX reference ---------------------------

def inverted_residual_block_ref(x, params, *, i, t, o, k, s, re=False, se=False):
    E = int(i * t)
    p_ = k // 2
    nl = _relu6 if re else _hswish

    def bn(v, g, b):
        m = jnp.mean(v, axis=(0, 2, 3), keepdims=True)
        var = jnp.mean(jnp.square(v), axis=(0, 2, 3), keepdims=True) - jnp.square(m)
        return (v - m) * jax.lax.rsqrt(var + EPS) * g[None, :, None, None] \
            + b[None, :, None, None]

    y = jnp.einsum("ec,nchw->nehw", params["w1"], x) + params["b1"][None, :, None, None]
    y = nl(bn(y, params["g1"], params["be1"]))
    wd = params["wd"].reshape(E, 1, k, k)
    y = jax.lax.conv_general_dilated(
        y, wd, (s, s), [(p_, p_), (p_, p_)],
        dimension_numbers=("NCHW", "OIHW", "NCHW"),
        feature_group_count=E) + params["bd"][None, :, None, None]
    y = nl(bn(y, params["g2"], params["be2"]))
    if se:
        pooled = jnp.mean(y, axis=(2, 3))                              # (N, E)
        h = jnp.maximum(pooled @ params["wse1"].T + params["bse1"], 0.0)
        gate = _hswish(h @ params["wse2"].T + params["bse2"])          # (N, E)
        y = y * gate[:, :, None, None]
    z = jnp.einsum("oe,nehw->nohw", params["w3"], y) + params["b3"][None, :, None, None]
    z = bn(z, params["g3"], params["be3"])
    if i == o and s == 1:
        z = z + x
    return z


if __name__ == "__main__":
    key = jax.random.PRNGKey(0)
    kx, kp, kx2, kp2 = jax.random.split(key, 4)

    # Config 1: i=4, t=2 -> expansion=8, o=4, k=3, s=1, h_swish, SE, shortcut.
    i, t, o, k, s = 4, 2.0, 4, 3, 1
    re, se = False, True
    x = jax.random.normal(kx, (2, i, 16, 16), jnp.float32)
    params = init_params(kp, i, t, o, k)
    ref = inverted_residual_block_ref(x, params, i=i, t=t, o=o, k=k, s=s,
                                      re=re, se=se)

    # Tight numerical check: f32 MXU operands and f32 intermediates.
    out = inverted_residual_block_pallas(x, params, i=i, t=t, o=o, k=k, s=s,
                                         re=re, se=se, mm_dtype=jnp.float32,
                                         store_dtype=jnp.float32)
    out = jax.block_until_ready(out)
    assert out.shape == (2, o, 16, 16), out.shape
    err = float(jnp.max(jnp.abs(out - ref)))
    assert jnp.allclose(out, ref, atol=2e-3, rtol=2e-3), f"f32 max abs err {err}"

    # Default (performance) path: bf16 MXU operands + bf16 HBM intermediates.
    out_bf = inverted_residual_block_pallas(x, params, i=i, t=t, o=o, k=k, s=s,
                                            re=re, se=se)
    out_bf = jax.block_until_ready(out_bf)
    err_bf = float(jnp.max(jnp.abs(out_bf - ref)))
    assert jnp.allclose(out_bf, ref, atol=2e-1, rtol=2e-1), \
        f"bf16 max abs err {err_bf}"

    # Config 2: k=5, ReLU6, no SE, no shortcut (i != o).
    i2, t2, o2, k2, s2 = 4, 3.0, 8, 5, 1
    re2, se2 = True, False
    x2 = jax.random.normal(kx2, (2, i2, 16, 16), jnp.float32)
    params2 = init_params(kp2, i2, t2, o2, k2)
    ref2 = inverted_residual_block_ref(x2, params2, i=i2, t=t2, o=o2, k=k2,
                                       s=s2, re=re2, se=se2)
    out2 = inverted_residual_block_pallas(x2, params2, i=i2, t=t2, o=o2, k=k2,
                                          s=s2, re=re2, se=se2,
                                          mm_dtype=jnp.float32,
                                          store_dtype=jnp.float32)
    out2 = jax.block_until_ready(out2)
    assert out2.shape == (2, o2, 16, 16), out2.shape
    err2 = float(jnp.max(jnp.abs(out2 - ref2)))
    assert jnp.allclose(out2, ref2, atol=2e-3, rtol=2e-3), f"cfg2 max abs err {err2}"

    print("KERNEL_OK")
</pallas_src>

<mosaic_0001>
module attributes {stable_mosaic.version = 11 : i64} {
  func.func @_expand_kernel(%arg0: i32, %arg1: memref<512x4xf32, #tpu.memory_space<vmem>>, %arg2: memref<4x8xf32, #tpu.memory_space<vmem>>, %arg3: memref<512x8xf32, #tpu.memory_space<vmem>>, %arg4: memref<1x2x8xf32, #tpu.memory_space<vmem>>) attributes {dimension_semantics = [#tpu.dimension_semantics<parallel>], iteration_bounds = array<i64: 1>, scalar_prefetch = 0 : i64, scratch_operands = 0 : i64, tpu.core_type = #tpu.core_type<tc>, window_params = [{transform_indices = @transform_0, window_bounds = array<i64: 512, 4>}, {pipeline_mode = #tpu.pipeline_mode<synchronous>, transform_indices = @transform_1, window_bounds = array<i64: 4, 8>}, {transform_indices = @transform_2, window_bounds = array<i64: 512, 8>}, {transform_indices = @transform_3, window_bounds = array<i64: 1, 2, 8>}]} {
    %c0 = arith.constant 0 : index
    %c0_0 = arith.constant 0 : index
    %0 = vector.load %arg1[%c0, %c0_0] : memref<512x4xf32, #tpu.memory_space<vmem>>, vector<512x4xf32>
    %c0_1 = arith.constant 0 : index
    %c0_2 = arith.constant 0 : index
    %1 = vector.load %arg2[%c0_1, %c0_2] : memref<4x8xf32, #tpu.memory_space<vmem>>, vector<4x8xf32>
    %cst = arith.constant dense<0.000000e+00> : vector<512x8xf32>
    %2 = tpu.matmul %0, %1, %cst {dimension_numbers = #tpu.dot_dimension_numbers<[1], [0], [0], [1], [0, 0, 1, 1], [], []>} : vector<512x4xf32>, vector<4x8xf32>, vector<512x8xf32> -> vector<512x8xf32>
    %c0_3 = arith.constant 0 : index
    %c0_4 = arith.constant 0 : index
    %3 = vector.load %arg3[%c0_3, %c0_4] : memref<512x8xf32, #tpu.memory_space<vmem>>, vector<512x8xf32>
    tpu.vector_store %arg3[%c0_3, %c0_4], %2 {strides = array<i32>} : memref<512x8xf32, #tpu.memory_space<vmem>>, vector<512x8xf32>,
    %cst_5 = arith.constant dense<0.000000e+00> : vector<8xf32>
    %4 = vector.multi_reduction <add>, %2, %cst_5 [0] : vector<512x8xf32> to vector<8xf32>
    %5 = vector.shape_cast %4 : vector<8xf32> to vector<1x8xf32>
    %6 = arith.mulf %2, %2 : vector<512x8xf32>
    %cst_6 = arith.constant dense<0.000000e+00> : vector<8xf32>
    %7 = vector.multi_reduction <add>, %6, %cst_6 [0] : vector<512x8xf32> to vector<8xf32>
    %8 = vector.shape_cast %7 : vector<8xf32> to vector<1x8xf32>
    %9 = tpu.concatenate %5, %8 in 0 : vector<1x8xf32>, vector<1x8xf32> -> vector<2x8xf32>
    %c0_7 = arith.constant 0 : index
    %c0_8 = arith.constant 0 : index
    %c0_9 = arith.constant 0 : index
    %10 = vector.load %arg4[%c0_7, %c0_8, %c0_9] : memref<1x2x8xf32, #tpu.memory_space<vmem>>, vector<1x2x8xf32>
    %11 = vector.shape_cast %10 : vector<1x2x8xf32> to vector<2x8xf32>
    %12 = vector.shape_cast %9 : vector<2x8xf32> to vector<1x2x8xf32>
    tpu.vector_store %arg4[%c0_7, %c0_8, %c0_9], %12 {strides = array<i32>} : memref<1x2x8xf32, #tpu.memory_space<vmem>>, vector<1x2x8xf32>,
    return
  }
  func.func @transform_0(%arg0: i32) -> (i32, i32) {
    %c0_i32 = arith.constant 0 : i32
    %c0_i32_0 = arith.constant 0 : i32
    return %arg0, %c0_i32 : i32, i32
  }
  func.func @transform_1(%arg0: i32) -> (i32, i32) {
    %c0_i32 = arith.constant 0 : i32
    %c0_i32_0 = arith.constant 0 : i32
    %c0_i32_1 = arith.constant 0 : i32
    return %c0_i32, %c0_i32_0 : i32, i32
  }
  func.func @transform_2(%arg0: i32) -> (i32, i32) {
    %c0_i32 = arith.constant 0 : i32
    %c0_i32_0 = arith.constant 0 : i32
    return %arg0, %c0_i32 : i32, i32
  }
  func.func @transform_3(%arg0: i32) -> (i32, i32, i32) {
    %c0_i32 = arith.constant 0 : i32
    %c0_i32_0 = arith.constant 0 : i32
    %c0_i32_1 = arith.constant 0 : i32
    return %arg0, %c0_i32, %c0_i32_0 : i32, i32, i32
  }
}

</mosaic_0001>

<llo_original>
// kernel: tpu_custom_call.1
$region0: #{tpu_custom_call.1}
  #allocation0 [shape = 'u32[]', space=smem, size = 0x4, offset = 0x4, fixed_abs, tag = 'smem constant byte address 0x4 - core index']
  #allocation1 [shape = 'u32[144,128]{1,0:T(1,128)}', space=vmem, size = 0x12000, scoped, tag = 'internal scratch']
  %s0 = inlined_call_operand.vmem [shape: f32[512,4], index: 0, kind: input, shape index: {}]
  %s1 = inlined_call_operand.vmem [shape: f32[4,8], index: 1, kind: input, shape index: {}]
  %s2 = inlined_call_operand.vmem [shape: f32[512,8], index: 2, kind: output, shape index: {0}]
  %s3 = inlined_call_operand.hbm [shape: f32[1,2,8], index: 3, kind: output, shape index: {1}]
  %4 = xla_tuple %s2, %s3
  %s5 = sld [smem:[#allocation0]]
  $region26: #{tpu_custom_call.1} parent=0
    _
  %s7 = ssub.s32 1, %s5
  %s8 = scalar_select 0, %s7, %s5
  $region1: #{tpu_custom_call.1} parent=0
    #allocation2 [shape = 'u8[1024]{0}', space=vmem, size = 0x400, scoped, tag = 'output window, operand 1, single buffered']
    #allocation3 [shape = 's32[1]{0}', space=sflag, size = 0x4, scoped, tag = 'scoped memory for tpu_custom_call.1']
    %9 = vsyncpa [#allocation3], 0
    // Predicated region
    $region2: #{tpu_custom_call.1} parent=1 // pred_check
      _
    $region3: #{tpu_custom_call.1} parent=1 // pred_check_branch
      %11 = sbr.rel (0) target = $region5
    $region4: #{tpu_custom_call.1} parent=1 // pred_region
      _
    $region5: #{tpu_custom_call.1} parent=1 // pred_fallthru
      _
    // Predicated region
    $region6: #{tpu_custom_call.1} parent=1 // pred_check
      _
    $region7: #{tpu_custom_call.1} parent=1 // pred_check_branch
      %13 = sbr.rel (0) target = $region9
    $region8: #{tpu_custom_call.1} parent=1 // pred_region
      _
    $region9: #{tpu_custom_call.1} parent=1 // pred_fallthru
      _
    %v14 = vld [vmem:[%s0] sm:$0xff]
    %v15 = vld [vmem:[%s0 + $0x8] sm:$0xff]
    %v16 = vld [vmem:[%s0 + $0x10] sm:$0xff]
    %v17 = vld [vmem:[%s0 + $0x18] sm:$0xff]
    %v18 = vld [vmem:[%s0 + $0x20] sm:$0xff]
    %v19 = vld [vmem:[%s0 + $0x28] sm:$0xff]
    %v20 = vld [vmem:[%s0 + $0x30] sm:$0xff]
    %v21 = vld [vmem:[%s0 + $0x38] sm:$0xff]
    %v22 = vld [vmem:[%s0 + $0x40] sm:$0xff]
    %v23 = vld [vmem:[%s0 + $0x48] sm:$0xff]
    %v24 = vld [vmem:[%s0 + $0x50] sm:$0xff]
    %v25 = vld [vmem:[%s0 + $0x58] sm:$0xff]
    %v26 = vld [vmem:[%s0 + $0x60] sm:$0xff]
    %v27 = vld [vmem:[%s0 + $0x68] sm:$0xff]
    %v28 = vld [vmem:[%s0 + $0x70] sm:$0xff]
    %v29 = vld [vmem:[%s0 + $0x78] sm:$0xff]
    %v30 = vld [vmem:[%s0 + $0x80] sm:$0xff]
    %v31 = vld [vmem:[%s0 + $0x88] sm:$0xff]
    %v32 = vld [vmem:[%s0 + $0x90] sm:$0xff]
    %v33 = vld [vmem:[%s0 + $0x98] sm:$0xff]
    %v34 = vld [vmem:[%s0 + $0xa0] sm:$0xff]
    %v35 = vld [vmem:[%s0 + $0xa8] sm:$0xff]
    %v36 = vld [vmem:[%s0 + $0xb0] sm:$0xff]
    %v37 = vld [vmem:[%s0 + $0xb8] sm:$0xff]
    %v38 = vld [vmem:[%s0 + $0xc0] sm:$0xff]
    %v39 = vld [vmem:[%s0 + $0xc8] sm:$0xff]
    %v40 = vld [vmem:[%s0 + $0xd0] sm:$0xff]
    %v41 = vld [vmem:[%s0 + $0xd8] sm:$0xff]
    %v42 = vld [vmem:[%s0 + $0xe0] sm:$0xff]
    %v43 = vld [vmem:[%s0 + $0xe8] sm:$0xff]
    %v44 = vld [vmem:[%s0 + $0xf0] sm:$0xff]
    %v45 = vld [vmem:[%s0 + $0xf8] sm:$0xff]
    %v46 = vld [vmem:[%s0 + $0x100] sm:$0xff]
    %v47 = vld [vmem:[%s0 + $0x108] sm:$0xff]
    %v48 = vld [vmem:[%s0 + $0x110] sm:$0xff]
    %v49 = vld [vmem:[%s0 + $0x118] sm:$0xff]
    %v50 = vld [vmem:[%s0 + $0x120] sm:$0xff]
    %v51 = vld [vmem:[%s0 + $0x128] sm:$0xff]
    %v52 = vld [vmem:[%s0 + $0x130] sm:$0xff]
    %v53 = vld [vmem:[%s0 + $0x138] sm:$0xff]
    %v54 = vld [vmem:[%s0 + $0x140] sm:$0xff]
    %v55 = vld [vmem:[%s0 + $0x148] sm:$0xff]
    %v56 = vld [vmem:[%s0 + $0x150] sm:$0xff]
    %v57 = vld [vmem:[%s0 + $0x158] sm:$0xff]
    %v58 = vld [vmem:[%s0 + $0x160] sm:$0xff]
    %v59 = vld [vmem:[%s0 + $0x168] sm:$0xff]
    %v60 = vld [vmem:[%s0 + $0x170] sm:$0xff]
    %v61 = vld [vmem:[%s0 + $0x178] sm:$0xff]
    %v62 = vld [vmem:[%s0 + $0x180] sm:$0xff]
    %v63 = vld [vmem:[%s0 + $0x188] sm:$0xff]
    %v64 = vld [vmem:[%s0 + $0x190] sm:$0xff]
    %v65 = vld [vmem:[%s0 + $0x198] sm:$0xff]
    %v66 = vld [vmem:[%s0 + $0x1a0] sm:$0xff]
    %v67 = vld [vmem:[%s0 + $0x1a8] sm:$0xff]
    %v68 = vld [vmem:[%s0 + $0x1b0] sm:$0xff]
    %v69 = vld [vmem:[%s0 + $0x1b8] sm:$0xff]
    %v70 = vld [vmem:[%s0 + $0x1c0] sm:$0xff]
    %v71 = vld [vmem:[%s0 + $0x1c8] sm:$0xff]
    %v72 = vld [vmem:[%s0 + $0x1d0] sm:$0xff]
    %v73 = vld [vmem:[%s0 + $0x1d8] sm:$0xff]
    %v74 = vld [vmem:[%s0 + $0x1e0] sm:$0xff]
    %v75 = vld [vmem:[%s0 + $0x1e8] sm:$0xff]
    %v76 = vld [vmem:[%s0 + $0x1f0] sm:$0xff]
    %v77 = vld [vmem:[%s0 + $0x1f8] sm:$0xff]
    %v78 = vld [vmem:[%s1] sm:$0xf]
    %vm79 = vcmask 31744
    %v81 = vsel %vm79, %v14, 0
    %v84 = vsel %vm79, %v15, 0
    %v87 = vsel %vm79, %v16, 0
    %v90 = vsel %vm79, %v17, 0
    %v93 = vsel %vm79, %v18, 0
    %v96 = vsel %vm79, %v19, 0
    %v99 = vsel %vm79, %v20, 0
    %v102 = vsel %vm79, %v21, 0
    %v105 = vsel %vm79, %v22, 0
    %v108 = vsel %vm79, %v23, 0
    %v111 = vsel %vm79, %v24, 0
    %v114 = vsel %vm79, %v25, 0
    %v117 = vsel %vm79, %v26, 0
    %v120 = vsel %vm79, %v27, 0
    %v123 = vsel %vm79, %v28, 0
    %v126 = vsel %vm79, %v29, 0
    %v129 = vsel %vm79, %v30, 0
    %v132 = vsel %vm79, %v31, 0
    %v135 = vsel %vm79, %v32, 0
    %v138 = vsel %vm79, %v33, 0
    %v141 = vsel %vm79, %v34, 0
    %v144 = vsel %vm79, %v35, 0
    %v147 = vsel %vm79, %v36, 0
    %v150 = vsel %vm79, %v37, 0
    %v153 = vsel %vm79, %v38, 0
    %v156 = vsel %vm79, %v39, 0
    %v159 = vsel %vm79, %v40, 0
    %v162 = vsel %vm79, %v41, 0
    %v165 = vsel %vm79, %v42, 0
    %v168 = vsel %vm79, %v43, 0
    %v171 = vsel %vm79, %v44, 0
    %v174 = vsel %vm79, %v45, 0
    %v177 = vsel %vm79, %v46, 0
    %v180 = vsel %vm79, %v47, 0
    %v183 = vsel %vm79, %v48, 0
    %v186 = vsel %vm79, %v49, 0
    %v189 = vsel %vm79, %v50, 0
    %v192 = vsel %vm79, %v51, 0
    %v195 = vsel %vm79, %v52, 0
    %v198 = vsel %vm79, %v53, 0
    %v201 = vsel %vm79, %v54, 0
    %v204 = vsel %vm79, %v55, 0
    %v207 = vsel %vm79, %v56, 0
    %v210 = vsel %vm79, %v57, 0
    %v213 = vsel %vm79, %v58, 0
    %v216 = vsel %vm79, %v59, 0
    %v219 = vsel %vm79, %v60, 0
    %v222 = vsel %vm79, %v61, 0
    %v225 = vsel %vm79, %v62, 0
    %v228 = vsel %vm79, %v63, 0
    %v231 = vsel %vm79, %v64, 0
    %v234 = vsel %vm79, %v65, 0
    %v237 = vsel %vm79, %v66, 0
    %v240 = vsel %vm79, %v67, 0
    %v243 = vsel %vm79, %v68, 0
    %v246 = vsel %vm79, %v69, 0
    %v249 = vsel %vm79, %v70, 0
    %v252 = vsel %vm79, %v71, 0
    %v255 = vsel %vm79, %v72, 0
    %v258 = vsel %vm79, %v73, 0
    %v261 = vsel %vm79, %v74, 0
    %v264 = vsel %vm79, %v75, 0
    %v267 = vsel %vm79, %v76, 0
    %v270 = vsel %vm79, %v77, 0
    %vm272 = vcmask 1043456
    %v274 = vsel %vm272, %v78, 0
    %276 = vmatprep.subr.mxu0 0.0
    %277 = vmatpush1.msra.mxu0 0.0
    %278 = vmatprep.subr.mxu0 0.0
    %279 = vmatpush1.msra.mxu0 0.0
    %280 = vmatprep.subr.mxu0 0.0
    %281 = vmatpush1.msra.mxu0 0.0
    %282 = vmatprep.subr.mxu0 0.0
    %283 = vmatpush1.msra.mxu0 0.0
    %284 = vmatprep.subr.mxu0 0.0
    %285 = vmatpush1.msra.mxu0 0.0
    %286 = vmatprep.subr.mxu0 0.0
    %287 = vmatpush1.msra.mxu0 0.0
    %288 = vmatprep.subr.mxu0 0.0
    %289 = vmatpush1.msra.mxu0 0.0
    %290 = vmatprep.subr.mxu0 0.0
    %291 = vmatpush1.msra.mxu0 0.0
    %292 = vmatprep.subr.mxu0 0.0
    %293 = vmatpush1.msra.mxu0 0.0
    %294 = vmatprep.subr.mxu0 0.0
    %295 = vmatpush1.msra.mxu0 0.0
    %296 = vmatprep.subr.mxu0 0.0
    %297 = vmatpush1.msra.mxu0 0.0
    %298 = vmatprep.subr.mxu0 0.0
    %299 = vmatpush1.msra.mxu0 0.0
    %300 = vmatprep.subr.mxu0 0.0
    %301 = vmatpush1.msra.mxu0 0.0
    %302 = vmatprep.subr.mxu0 0.0
    %303 = vmatpush1.msra.mxu0 0.0
    %304 = vmatprep.subr.mxu0 0.0
    %305 = vmatpush1.msra.mxu0 0.0
    %306 = vmatprep.subr.mxu0 0.0
    %307 = vmatpush1.msra.mxu0 %v274
    %308 = vmatprep.subr.mxu0 0.0
    %309 = vmatpush2.msra.mxu0 0.0
    %310 = vmatprep.subr.mxu0 0.0
    %311 = vmatpush2.msra.mxu0 0.0
    %312 = vmatprep.subr.mxu0 0.0
    %313 = vmatpush2.msra.mxu0 0.0
    %314 = vmatprep.subr.mxu0 0.0
    %315 = vmatpush2.msra.mxu0 0.0
    %316 = vmatprep.subr.mxu0 0.0
    %317 = vmatpush2.msra.mxu0 0.0
    %318 = vmatprep.subr.mxu0 0.0
    %319 = vmatpush2.msra.mxu0 0.0
    %320 = vmatprep.subr.mxu0 0.0
    %321 = vmatpush2.msra.mxu0 0.0
    %322 = vmatprep.subr.mxu0 0.0
    %323 = vmatpush2.msra.mxu0 0.0
    %324 = vmatprep.subr.mxu0 0.0
    %325 = vmatpush2.msra.mxu0 0.0
    %326 = vmatprep.subr.mxu0 0.0
    %327 = vmatpush2.msra.mxu0 0.0
    %328 = vmatprep.subr.mxu0 0.0
    %329 = vmatpush2.msra.mxu0 0.0
    %330 = vmatprep.subr.mxu0 0.0
    %331 = vmatpush2.msra.mxu0 0.0
    %332 = vmatprep.subr.mxu0 0.0
    %333 = vmatpush2.msra.mxu0 0.0
    %334 = vmatprep.subr.mxu0 0.0
    %335 = vmatpush2.msra.mxu0 0.0
    %336 = vmatprep.subr.mxu0 0.0
    %337 = vmatpush2.msra.mxu0 0.0
    %338 = vmatprep.subr.mxu0 0.0
    %339 = vmatpush2.msra.mxu0 0.0
    %340 = vmatprep.mubr.f32.mxu0 0.0
    %341 = vmatmul.mubr.f32.gmra.mxu0 %v81
    %v342 = vpop.f32.mrf.mxu0
    %v343 = vadd.f32 0.0, %v342
    %v344 = vpop.f32.mrf.mxu0
    %345 = vmatprep.mubr.f32.mxu0 0.0
    %346 = vmatmul.mubr.f32.gmra.mxu0 %v84
    %v347 = vpop.f32.mrf.mxu0
    %v348 = vadd.f32 0.0, %v347
    %v349 = vpop.f32.mrf.mxu0
    %350 = vmatprep.mubr.f32.mxu0 0.0
    %351 = vmatmul.mubr.f32.gmra.mxu0 %v87
    %v352 = vpop.f32.mrf.mxu0
    %v353 = vadd.f32 0.0, %v352
    %v354 = vpop.f32.mrf.mxu0
    %355 = vmatprep.mubr.f32.mxu0 0.0
    %356 = vmatmul.mubr.f32.gmra.mxu0 %v90
    %v357 = vpop.f32.mrf.mxu0
    %v358 = vadd.f32 0.0, %v357
    %v359 = vpop.f32.mrf.mxu0
    %360 = vmatprep.mubr.f32.mxu0 0.0
    %361 = vmatmul.mubr.f32.gmra.mxu0 %v93
    %v362 = vpop.f32.mrf.mxu0
    %v363 = vadd.f32 0.0, %v362
    %v364 = vpop.f32.mrf.mxu0
    %365 = vmatprep.mubr.f32.mxu0 0.0
    %366 = vmatmul.mubr.f32.gmra.mxu0 %v96
    %v367 = vpop.f32.mrf.mxu0
    %v368 = vadd.f32 0.0, %v367
    %v369 = vpop.f32.mrf.mxu0
    %370 = vmatprep.mubr.f32.mxu0 0.0
    %371 = vmatmul.mubr.f32.gmra.mxu0 %v99
    %v372 = vpop.f32.mrf.mxu0
    %v373 = vadd.f32 0.0, %v372
    %v374 = vpop.f32.mrf.mxu0
    %375 = vmatprep.mubr.f32.mxu0 0.0
    %376 = vmatmul.mubr.f32.gmra.mxu0 %v102
    %v377 = vpop.f32.mrf.mxu0
    %v378 = vadd.f32 0.0, %v377
    %v379 = vpop.f32.mrf.mxu0
    %380 = vmatprep.mubr.f32.mxu0 0.0
    %381 = vmatmul.mubr.f32.gmra.mxu0 %v105
    %v382 = vpop.f32.mrf.mxu0
    %v383 = vadd.f32 0.0, %v382
    %v384 = vpop.f32.mrf.mxu0
    %385 = vmatprep.mubr.f32.mxu0 0.0
    %386 = vmatmul.mubr.f32.gmra.mxu0 %v108
    %v387 = vpop.f32.mrf.mxu0
    %v388 = vadd.f32 0.0, %v387
    %v389 = vpop.f32.mrf.mxu0
    %390 = vmatprep.mubr.f32.mxu0 0.0
    %391 = vmatmul.mubr.f32.gmra.mxu0 %v111
    %v392 = vpop.f32.mrf.mxu0
    %v393 = vadd.f32 0.0, %v392
    %v394 = vpop.f32.mrf.mxu0
    %395 = vmatprep.mubr.f32.mxu0 0.0
    %396 = vmatmul.mubr.f32.gmra.mxu0 %v114
    %v397 = vpop.f32.mrf.mxu0
    %v398 = vadd.f32 0.0, %v397
    %v399 = vpop.f32.mrf.mxu0
    %400 = vmatprep.mubr.f32.mxu0 0.0
    %401 = vmatmul.mubr.f32.gmra.mxu0 %v117
    %v402 = vpop.f32.mrf.mxu0
    %v403 = vadd.f32 0.0, %v402
    %v404 = vpop.f32.mrf.mxu0
    %405 = vmatprep.mubr.f32.mxu0 0.0
    %406 = vmatmul.mubr.f32.gmra.mxu0 %v120
    %v407 = vpop.f32.mrf.mxu0
    %v408 = vadd.f32 0.0, %v407
    %v409 = vpop.f32.mrf.mxu0
    %410 = vmatprep.mubr.f32.mxu0 0.0
    %411 = vmatmul.mubr.f32.gmra.mxu0 %v123
    %v412 = vpop.f32.mrf.mxu0
    %v413 = vadd.f32 0.0, %v412
    %v414 = vpop.f32.mrf.mxu0
    %415 = vmatprep.mubr.f32.mxu0 0.0
    %416 = vmatmul.mubr.f32.gmra.mxu0 %v126
    %v417 = vpop.f32.mrf.mxu0
    %v418 = vadd.f32 0.0, %v417
    %v419 = vpop.f32.mrf.mxu0
    %420 = vmatprep.mubr.f32.mxu0 0.0
    %421 = vmatmul.mubr.f32.gmra.mxu0 %v129
    %v422 = vpop.f32.mrf.mxu0
    %v423 = vadd.f32 0.0, %v422
    %v424 = vpop.f32.mrf.mxu0
    %425 = vmatprep.mubr.f32.mxu0 0.0
    %426 = vmatmul.mubr.f32.gmra.mxu0 %v132
    %v427 = vpop.f32.mrf.mxu0
    %v428 = vadd.f32 0.0, %v427
    %v429 = vpop.f32.mrf.mxu0
    %430 = vmatprep.mubr.f32.mxu0 0.0
    %431 = vmatmul.mubr.f32.gmra.mxu0 %v135
    %v432 = vpop.f32.mrf.mxu0
    %v433 = vadd.f32 0.0, %v432
    %v434 = vpop.f32.mrf.mxu0
    %435 = vmatprep.mubr.f32.mxu0 0.0
    %436 = vmatmul.mubr.f32.gmra.mxu0 %v138
    %v437 = vpop.f32.mrf.mxu0
    %v438 = vadd.f32 0.0, %v437
    %v439 = vpop.f32.mrf.mxu0
    %440 = vmatprep.mubr.f32.mxu0 0.0
    %441 = vmatmul.mubr.f32.gmra.mxu0 %v141
    %v442 = vpop.f32.mrf.mxu0
    %v443 = vadd.f32 0.0, %v442
    %v444 = vpop.f32.mrf.mxu0
    %445 = vmatprep.mubr.f32.mxu0 0.0
    %446 = vmatmul.mubr.f32.gmra.mxu0 %v144
    %v447 = vpop.f32.mrf.mxu0
    %v448 = vadd.f32 0.0, %v447
    %v449 = vpop.f32.mrf.mxu0
    %450 = vmatprep.mubr.f32.mxu0 0.0
    %451 = vmatmul.mubr.f32.gmra.mxu0 %v147
    %v452 = vpop.f32.mrf.mxu0
    %v453 = vadd.f32 0.0, %v452
    %v454 = vpop.f32.mrf.mxu0
    %455 = vmatprep.mubr.f32.mxu0 0.0
    %456 = vmatmul.mubr.f32.gmra.mxu0 %v150
    %v457 = vpop.f32.mrf.mxu0
    %v458 = vadd.f32 0.0, %v457
    %v459 = vpop.f32.mrf.mxu0
    %460 = vmatprep.mubr.f32.mxu0 0.0
    %461 = vmatmul.mubr.f32.gmra.mxu0 %v153
    %v462 = vpop.f32.mrf.mxu0
    %v463 = vadd.f32 0.0, %v462
    %v464 = vpop.f32.mrf.mxu0
    %465 = vmatprep.mubr.f32.mxu0 0.0
    %466 = vmatmul.mubr.f32.gmra.mxu0 %v156
    %v467 = vpop.f32.mrf.mxu0
    %v468 = vadd.f32 0.0, %v467
    %v469 = vpop.f32.mrf.mxu0
    %470 = vmatprep.mubr.f32.mxu0 0.0
    %471 = vmatmul.mubr.f32.gmra.mxu0 %v159
    %v472 = vpop.f32.mrf.mxu0
    %v473 = vadd.f32 0.0, %v472
    %v474 = vpop.f32.mrf.mxu0
    %475 = vmatprep.mubr.f32.mxu0 0.0
    %476 = vmatmul.mubr.f32.gmra.mxu0 %v162
    %v477 = vpop.f32.mrf.mxu0
    %v478 = vadd.f32 0.0, %v477
    %v479 = vpop.f32.mrf.mxu0
    %480 = vmatprep.mubr.f32.mxu0 0.0
    %481 = vmatmul.mubr.f32.gmra.mxu0 %v165
    %v482 = vpop.f32.mrf.mxu0
    %v483 = vadd.f32 0.0, %v482
    %v484 = vpop.f32.mrf.mxu0
    %485 = vmatprep.mubr.f32.mxu0 0.0
    %486 = vmatmul.mubr.f32.gmra.mxu0 %v168
    %v487 = vpop.f32.mrf.mxu0
    %v488 = vadd.f32 0.0, %v487
    %v489 = vpop.f32.mrf.mxu0
    %490 = vmatprep.mubr.f32.mxu0 0.0
    %491 = vmatmul.mubr.f32.gmra.mxu0 %v171
    %v492 = vpop.f32.mrf.mxu0
    %v493 = vadd.f32 0.0, %v492
    %v494 = vpop.f32.mrf.mxu0
    %495 = vmatprep.mubr.f32.mxu0 0.0
    %496 = vmatmul.mubr.f32.gmra.mxu0 %v174
    %v497 = vpop.f32.mrf.mxu0
    %v498 = vadd.f32 0.0, %v497
    %v499 = vpop.f32.mrf.mxu0
    %500 = vmatprep.mubr.f32.mxu0 0.0
    %501 = vmatmul.mubr.f32.gmra.mxu0 %v177
    %v502 = vpop.f32.mrf.mxu0
    %v503 = vadd.f32 0.0, %v502
    %v504 = vpop.f32.mrf.mxu0
    %505 = vmatprep.mubr.f32.mxu0 0.0
    %506 = vmatmul.mubr.f32.gmra.mxu0 %v180
    %v507 = vpop.f32.mrf.mxu0
    %v508 = vadd.f32 0.0, %v507
    %v509 = vpop.f32.mrf.mxu0
    %510 = vmatprep.mubr.f32.mxu0 0.0
    %511 = vmatmul.mubr.f32.gmra.mxu0 %v183
    %v512 = vpop.f32.mrf.mxu0
    %v513 = vadd.f32 0.0, %v512
    %v514 = vpop.f32.mrf.mxu0
    %515 = vmatprep.mubr.f32.mxu0 0.0
    %516 = vmatmul.mubr.f32.gmra.mxu0 %v186
    %v517 = vpop.f32.mrf.mxu0
    %v518 = vadd.f32 0.0, %v517
    %v519 = vpop.f32.mrf.mxu0
    %520 = vmatprep.mubr.f32.mxu0 0.0
    %521 = vmatmul.mubr.f32.gmra.mxu0 %v189
    %v522 = vpop.f32.mrf.mxu0
    %v523 = vadd.f32 0.0, %v522
    %v524 = vpop.f32.mrf.mxu0
    %525 = vmatprep.mubr.f32.mxu0 0.0
    %526 = vmatmul.mubr.f32.gmra.mxu0 %v192
    %v527 = vpop.f32.mrf.mxu0
    %v528 = vadd.f32 0.0, %v527
    %v529 = vpop.f32.mrf.mxu0
    %530 = vmatprep.mubr.f32.mxu0 0.0
    %531 = vmatmul.mubr.f32.gmra.mxu0 %v195
    %v532 = vpop.f32.mrf.mxu0
    %v533 = vadd.f32 0.0, %v532
    %v534 = vpop.f32.mrf.mxu0
    %535 = vmatprep.mubr.f32.mxu0 0.0
    %536 = vmatmul.mubr.f32.gmra.mxu0 %v198
    %v537 = vpop.f32.mrf.mxu0
    %v538 = vadd.f32 0.0, %v537
    %v539 = vpop.f32.mrf.mxu0
    %540 = vmatprep.mubr.f32.mxu0 0.0
    %541 = vmatmul.mubr.f32.gmra.mxu0 %v201
    %v542 = vpop.f32.mrf.mxu0
    %v543 = vadd.f32 0.0, %v542
    %v544 = vpop.f32.mrf.mxu0
    %545 = vmatprep.mubr.f32.mxu0 0.0
    %546 = vmatmul.mubr.f32.gmra.mxu0 %v204
    %v547 = vpop.f32.mrf.mxu0
    %v548 = vadd.f32 0.0, %v547
    %v549 = vpop.f32.mrf.mxu0
    %550 = vmatprep.mubr.f32.mxu0 0.0
    %551 = vmatmul.mubr.f32.gmra.mxu0 %v207
    %v552 = vpop.f32.mrf.mxu0
    %v553 = vadd.f32 0.0, %v552
    %v554 = vpop.f32.mrf.mxu0
    %555 = vmatprep.mubr.f32.mxu0 0.0
    %556 = vmatmul.mubr.f32.gmra.mxu0 %v210
    %v557 = vpop.f32.mrf.mxu0
    %v558 = vadd.f32 0.0, %v557
    %v559 = vpop.f32.mrf.mxu0
    %560 = vmatprep.mubr.f32.mxu0 0.0
    %561 = vmatmul.mubr.f32.gmra.mxu0 %v213
    %v562 = vpop.f32.mrf.mxu0
    %v563 = vadd.f32 0.0, %v562
    %v564 = vpop.f32.mrf.mxu0
    %565 = vmatprep.mubr.f32.mxu0 0.0
    %566 = vmatmul.mubr.f32.gmra.mxu0 %v216
    %v567 = vpop.f32.mrf.mxu0
    %v568 = vadd.f32 0.0, %v567
    %v569 = vpop.f32.mrf.mxu0
    %570 = vmatprep.mubr.f32.mxu0 0.0
    %571 = vmatmul.mubr.f32.gmra.mxu0 %v219
    %v572 = vpop.f32.mrf.mxu0
    %v573 = vadd.f32 0.0, %v572
    %v574 = vpop.f32.mrf.mxu0
    %575 = vmatprep.mubr.f32.mxu0 0.0
    %576 = vmatmul.mubr.f32.gmra.mxu0 %v222
    %v577 = vpop.f32.mrf.mxu0
    %v578 = vadd.f32 0.0, %v577
    %v579 = vpop.f32.mrf.mxu0
    %580 = vmatprep.mubr.f32.mxu0 0.0
    %581 = vmatmul.mubr.f32.gmra.mxu0 %v225
    %v582 = vpop.f32.mrf.mxu0
    %v583 = vadd.f32 0.0, %v582
    %v584 = vpop.f32.mrf.mxu0
    %585 = vmatprep.mubr.f32.mxu0 0.0
    %586 = vmatmul.mubr.f32.gmra.mxu0 %v228
    %v587 = vpop.f32.mrf.mxu0
    %v588 = vadd.f32 0.0, %v587
    %v589 = vpop.f32.mrf.mxu0
    %590 = vmatprep.mubr.f32.mxu0 0.0
    %591 = vmatmul.mubr.f32.gmra.mxu0 %v231
    %v592 = vpop.f32.mrf.mxu0
    %v593 = vadd.f32 0.0, %v592
    %v594 = vpop.f32.mrf.mxu0
    %595 = vmatprep.mubr.f32.mxu0 0.0
    %596 = vmatmul.mubr.f32.gmra.mxu0 %v234
    %v597 = vpop.f32.mrf.mxu0
    %v598 = vadd.f32 0.0, %v597
    %v599 = vpop.f32.mrf.mxu0
    %600 = vmatprep.mubr.f32.mxu0 0.0
    %601 = vmatmul.mubr.f32.gmra.mxu0 %v237
    %v602 = vpop.f32.mrf.mxu0
    %v603 = vadd.f32 0.0, %v602
    %v604 = vpop.f32.mrf.mxu0
    %605 = vmatprep.mubr.f32.mxu0 0.0
    %606 = vmatmul.mubr.f32.gmra.mxu0 %v240
    %v607 = vpop.f32.mrf.mxu0
    %v608 = vadd.f32 0.0, %v607
    %v609 = vpop.f32.mrf.mxu0
    %610 = vmatprep.mubr.f32.mxu0 0.0
    %611 = vmatmul.mubr.f32.gmra.mxu0 %v243
    %v612 = vpop.f32.mrf.mxu0
    %v613 = vadd.f32 0.0, %v612
    %v614 = vpop.f32.mrf.mxu0
    %615 = vmatprep.mubr.f32.mxu0 0.0
    %616 = vmatmul.mubr.f32.gmra.mxu0 %v246
    %v617 = vpop.f32.mrf.mxu0
    %v618 = vadd.f32 0.0, %v617
    %v619 = vpop.f32.mrf.mxu0
    %620 = vmatprep.mubr.f32.mxu0 0.0
    %621 = vmatmul.mubr.f32.gmra.mxu0 %v249
    %v622 = vpop.f32.mrf.mxu0
    %v623 = vadd.f32 0.0, %v622
    %v624 = vpop.f32.mrf.mxu0
    %625 = vmatprep.mubr.f32.mxu0 0.0
    %626 = vmatmul.mubr.f32.gmra.mxu0 %v252
    %v627 = vpop.f32.mrf.mxu0
    %v628 = vadd.f32 0.0, %v627
    %v629 = vpop.f32.mrf.mxu0
    %630 = vmatprep.mubr.f32.mxu0 0.0
    %631 = vmatmul.mubr.f32.gmra.mxu0 %v255
    %v632 = vpop.f32.mrf.mxu0
    %v633 = vadd.f32 0.0, %v632
    %v634 = vpop.f32.mrf.mxu0
    %635 = vmatprep.mubr.f32.mxu0 0.0
    %636 = vmatmul.mubr.f32.gmra.mxu0 %v258
    %v637 = vpop.f32.mrf.mxu0
    %v638 = vadd.f32 0.0, %v637
    %v639 = vpop.f32.mrf.mxu0
    %640 = vmatprep.mubr.f32.mxu0 0.0
    %641 = vmatmul.mubr.f32.gmra.mxu0 %v261
    %v642 = vpop.f32.mrf.mxu0
    %v643 = vadd.f32 0.0, %v642
    %v644 = vpop.f32.mrf.mxu0
    %645 = vmatprep.mubr.f32.mxu0 0.0
    %646 = vmatmul.mubr.f32.gmra.mxu0 %v264
    %v647 = vpop.f32.mrf.mxu0
    %v648 = vadd.f32 0.0, %v647
    %v649 = vpop.f32.mrf.mxu0
    %650 = vmatprep.mubr.f32.mxu0 0.0
    %651 = vmatmul.mubr.f32.gmra.mxu0 %v267
    %v652 = vpop.f32.mrf.mxu0
    %v653 = vadd.f32 0.0, %v652
    %v654 = vpop.f32.mrf.mxu0
    %655 = vmatprep.mubr.f32.mxu0 0.0
    %656 = vmatmul.mubr.f32.gmra.mxu0 %v270
    %v657 = vpop.f32.mrf.mxu0
    %v658 = vadd.f32 0.0, %v657
    %v659 = vpop.f32.mrf.mxu0
    %660 = vdwg.mxu0
    %vm661 = vcmask 64512
    %662 = vst.msk [vmem:[%s2] sm:$0xff] %vm661, %v343
    %663 = vst.msk [vmem:[%s2 + $0x8] sm:$0xff] %vm661, %v348
    %664 = vst.msk [vmem:[%s2 + $0x10] sm:$0xff] %vm661, %v353
    %665 = vst.msk [vmem:[%s2 + $0x18] sm:$0xff] %vm661, %v358
    %666 = vst.msk [vmem:[%s2 + $0x20] sm:$0xff] %vm661, %v363
    %667 = vst.msk [vmem:[%s2 + $0x28] sm:$0xff] %vm661, %v368
    %668 = vst.msk [vmem:[%s2 + $0x30] sm:$0xff] %vm661, %v373
    %669 = vst.msk [vmem:[%s2 + $0x38] sm:$0xff] %vm661, %v378
    %670 = vst.msk [vmem:[%s2 + $0x40] sm:$0xff] %vm661, %v383
    %671 = vst.msk [vmem:[%s2 + $0x48] sm:$0xff] %vm661, %v388
    %672 = vst.msk [vmem:[%s2 + $0x50] sm:$0xff] %vm661, %v393
    %673 = vst.msk [vmem:[%s2 + $0x58] sm:$0xff] %vm661, %v398
    %674 = vst.msk [vmem:[%s2 + $0x60] sm:$0xff] %vm661, %v403
    %675 = vst.msk [vmem:[%s2 + $0x68] sm:$0xff] %vm661, %v408
    %676 = vst.msk [vmem:[%s2 + $0x70] sm:$0xff] %vm661, %v413
    %677 = vst.msk [vmem:[%s2 + $0x78] sm:$0xff] %vm661, %v418
    %678 = vst.msk [vmem:[%s2 + $0x80] sm:$0xff] %vm661, %v423
    %679 = vst.msk [vmem:[%s2 + $0x88] sm:$0xff] %vm661, %v428
    %680 = vst.msk [vmem:[%s2 + $0x90] sm:$0xff] %vm661, %v433
    %681 = vst.msk [vmem:[%s2 + $0x98] sm:$0xff] %vm661, %v438
    %682 = vst.msk [vmem:[%s2 + $0xa0] sm:$0xff] %vm661, %v443
    %683 = vst.msk [vmem:[%s2 + $0xa8] sm:$0xff] %vm661, %v448
    %684 = vst.msk [vmem:[%s2 + $0xb0] sm:$0xff] %vm661, %v453
    %685 = vst.msk [vmem:[%s2 + $0xb8] sm:$0xff] %vm661, %v458
    %686 = vst.msk [vmem:[%s2 + $0xc0] sm:$0xff] %vm661, %v463
    %687 = vst.msk [vmem:[%s2 + $0xc8] sm:$0xff] %vm661, %v468
    %688 = vst.msk [vmem:[%s2 + $0xd0] sm:$0xff] %vm661, %v473
    %689 = vst.msk [vmem:[%s2 + $0xd8] sm:$0xff] %vm661, %v478
    %690 = vst.msk [vmem:[%s2 + $0xe0] sm:$0xff] %vm661, %v483
    %691 = vst.msk [vmem:[%s2 + $0xe8] sm:$0xff] %vm661, %v488
    %692 = vst.msk [vmem:[%s2 + $0xf0] sm:$0xff] %vm661, %v493
    %693 = vst.msk [vmem:[%s2 + $0xf8] sm:$0xff] %vm661, %v498
    %694 = vst.msk [vmem:[%s2 + $0x100] sm:$0xff] %vm661, %v503
    %695 = vst.msk [vmem:[%s2 + $0x108] sm:$0xff] %vm661, %v508
    %696 = vst.msk [vmem:[%s2 + $0x110] sm:$0xff] %vm661, %v513
    %697 = vst.msk [vmem:[%s2 + $0x118] sm:$0xff] %vm661, %v518
    %698 = vst.msk [vmem:[%s2 + $0x120] sm:$0xff] %vm661, %v523
    %699 = vst.msk [vmem:[%s2 + $0x128] sm:$0xff] %vm661, %v528
    %700 = vst.msk [vmem:[%s2 + $0x130] sm:$0xff] %vm661, %v533
    %701 = vst.msk [vmem:[%s2 + $0x138] sm:$0xff] %vm661, %v538
    %702 = vst.msk [vmem:[%s2 + $0x140] sm:$0xff] %vm661, %v543
    %703 = vst.msk [vmem:[%s2 + $0x148] sm:$0xff] %vm661, %v548
    %704 = vst.msk [vmem:[%s2 + $0x150] sm:$0xff] %vm661, %v553
    %705 = vst.msk [vmem:[%s2 + $0x158] sm:$0xff] %vm661, %v558
    %706 = vst.msk [vmem:[%s2 + $0x160] sm:$0xff] %vm661, %v563
    %707 = vst.msk [vmem:[%s2 + $0x168] sm:$0xff] %vm661, %v568
    %708 = vst.msk [vmem:[%s2 + $0x170] sm:$0xff] %vm661, %v573
    %709 = vst.msk [vmem:[%s2 + $0x178] sm:$0xff] %vm661, %v578
    %710 = vst.msk [vmem:[%s2 + $0x180] sm:$0xff] %vm661, %v583
    %711 = vst.msk [vmem:[%s2 + $0x188] sm:$0xff] %vm661, %v588
    %712 = vst.msk [vmem:[%s2 + $0x190] sm:$0xff] %vm661, %v593
    %713 = vst.msk [vmem:[%s2 + $0x198] sm:$0xff] %vm661, %v598
    %714 = vst.msk [vmem:[%s2 + $0x1a0] sm:$0xff] %vm661, %v603
    %715 = vst.msk [vmem:[%s2 + $0x1a8] sm:$0xff] %vm661, %v608
    %716 = vst.msk [vmem:[%s2 + $0x1b0] sm:$0xff] %vm661, %v613
    %717 = vst.msk [vmem:[%s2 + $0x1b8] sm:$0xff] %vm661, %v618
    %718 = vst.msk [vmem:[%s2 + $0x1c0] sm:$0xff] %vm661, %v623
    %719 = vst.msk [vmem:[%s2 + $0x1c8] sm:$0xff] %vm661, %v628
    %720 = vst.msk [vmem:[%s2 + $0x1d0] sm:$0xff] %vm661, %v633
    %721 = vst.msk [vmem:[%s2 + $0x1d8] sm:$0xff] %vm661, %v638
    %722 = vst.msk [vmem:[%s2 + $0x1e0] sm:$0xff] %vm661, %v643
    %723 = vst.msk [vmem:[%s2 + $0x1e8] sm:$0xff] %vm661, %v648
    %724 = vst.msk [vmem:[%s2 + $0x1f0] sm:$0xff] %vm661, %v653
    %725 = vst.msk [vmem:[%s2 + $0x1f8] sm:$0xff] %vm661, %v658
    %v726 = vsel %vm661, %v343, 0.0
    %v727 = vsel %vm661, %v348, 0.0
    %v728 = vadd.f32 %v726, %v727
    %v729 = vsel %vm661, %v353, 0.0
    %v730 = vadd.f32 %v728, %v729
    %v731 = vsel %vm661, %v358, 0.0
    %v732 = vadd.f32 %v730, %v731
    %v733 = vsel %vm661, %v363, 0.0
    %v734 = vadd.f32 %v732, %v733
    %v735 = vsel %vm661, %v368, 0.0
    %v736 = vadd.f32 %v734, %v735
    %v737 = vsel %vm661, %v373, 0.0
    %v738 = vadd.f32 %v736, %v737
    %v739 = vsel %vm661, %v378, 0.0
    %v740 = vadd.f32 %v738, %v739
    %v741 = vsel %vm661, %v383, 0.0
    %v742 = vadd.f32 %v740, %v741
    %v743 = vsel %vm661, %v388, 0.0
    %v744 = vadd.f32 %v742, %v743
    %v745 = vsel %vm661, %v393, 0.0
    %v746 = vadd.f32 %v744, %v745
    %v747 = vsel %vm661, %v398, 0.0
    %v748 = vadd.f32 %v746, %v747
    %v749 = vsel %vm661, %v403, 0.0
    %v750 = vadd.f32 %v748, %v749
    %v751 = vsel %vm661, %v408, 0.0
    %v752 = vadd.f32 %v750, %v751
    %v753 = vsel %vm661, %v413, 0.0
    %v754 = vadd.f32 %v752, %v753
    %v755 = vsel %vm661, %v418, 0.0
    %v756 = vadd.f32 %v754, %v755
    %v757 = vsel %vm661, %v423, 0.0
    %v758 = vadd.f32 %v756, %v757
    %v759 = vsel %vm661, %v428, 0.0
    %v760 = vadd.f32 %v758, %v759
    %v761 = vsel %vm661, %v433, 0.0
    %v762 = vadd.f32 %v760, %v761
    %v763 = vsel %vm661, %v438, 0.0
    %v764 = vadd.f32 %v762, %v763
    %v765 = vsel %vm661, %v443, 0.0
    %v766 = vadd.f32 %v764, %v765
    %v767 = vsel %vm661, %v448, 0.0
    %v768 = vadd.f32 %v766, %v767
    %v769 = vsel %vm661, %v453, 0.0
    %v770 = vadd.f32 %v768, %v769
    %v771 = vsel %vm661, %v458, 0.0
    %v772 = vadd.f32 %v770, %v771
    %v773 = vsel %vm661, %v463, 0.0
    %v774 = vadd.f32 %v772, %v773
    %v775 = vsel %vm661, %v468, 0.0
    %v776 = vadd.f32 %v774, %v775
    %v777 = vsel %vm661, %v473, 0.0
    %v778 = vadd.f32 %v776, %v777
    %v779 = vsel %vm661, %v478, 0.0
    %v780 = vadd.f32 %v778, %v779
    %v781 = vsel %vm661, %v483, 0.0
    %v782 = vadd.f32 %v780, %v781
    %v783 = vsel %vm661, %v488, 0.0
    %v784 = vadd.f32 %v782, %v783
    %v785 = vsel %vm661, %v493, 0.0
    %v786 = vadd.f32 %v784, %v785
    %v787 = vsel %vm661, %v498, 0.0
    %v788 = vadd.f32 %v786, %v787
    %v789 = vsel %vm661, %v503, 0.0
    %v790 = vadd.f32 %v788, %v789
    %v791 = vsel %vm661, %v508, 0.0
    %v792 = vadd.f32 %v790, %v791
    %v793 = vsel %vm661, %v513, 0.0
    %v794 = vadd.f32 %v792, %v793
    %v795 = vsel %vm661, %v518, 0.0
    %v796 = vadd.f32 %v794, %v795
    %v797 = vsel %vm661, %v523, 0.0
    %v798 = vadd.f32 %v796, %v797
    %v799 = vsel %vm661, %v528, 0.0
    %v800 = vadd.f32 %v798, %v799
    %v801 = vsel %vm661, %v533, 0.0
    %v802 = vadd.f32 %v800, %v801
    %v803 = vsel %vm661, %v538, 0.0
    %v804 = vadd.f32 %v802, %v803
    %v805 = vsel %vm661, %v543, 0.0
    %v806 = vadd.f32 %v804, %v805
    %v807 = vsel %vm661, %v548, 0.0
    %v808 = vadd.f32 %v806, %v807
    %v809 = vsel %vm661, %v553, 0.0
    %v810 = vadd.f32 %v808, %v809
    %v811 = vsel %vm661, %v558, 0.0
    %v812 = vadd.f32 %v810, %v811
    %v813 = vsel %vm661, %v563, 0.0
    %v814 = vadd.f32 %v812, %v813
    %v815 = vsel %vm661, %v568, 0.0
    %v816 = vadd.f32 %v814, %v815
    %v817 = vsel %vm661, %v573, 0.0
    %v818 = vadd.f32 %v816, %v817
    %v819 = vsel %vm661, %v578, 0.0
    %v820 = vadd.f32 %v818, %v819
    %v821 = vsel %vm661, %v583, 0.0
    %v822 = vadd.f32 %v820, %v821
    %v823 = vsel %vm661, %v588, 0.0
    %v824 = vadd.f32 %v822, %v823
    %v825 = vsel %vm661, %v593, 0.0
    %v826 = vadd.f32 %v824, %v825
    %v827 = vsel %vm661, %v598, 0.0
    %v828 = vadd.f32 %v826, %v827
    %v829 = vsel %vm661, %v603, 0.0
    %v830 = vadd.f32 %v828, %v829
    %v831 = vsel %vm661, %v608, 0.0
    %v832 = vadd.f32 %v830, %v831
    %v833 = vsel %vm661, %v613, 0.0
    %v834 = vadd.f32 %v832, %v833
    %v835 = vsel %vm661, %v618, 0.0
    %v836 = vadd.f32 %v834, %v835
    %v837 = vsel %vm661, %v623, 0.0
    %v838 = vadd.f32 %v836, %v837
    %v839 = vsel %vm661, %v628, 0.0
    %v840 = vadd.f32 %v838, %v839
    %v841 = vsel %vm661, %v633, 0.0
    %v842 = vadd.f32 %v840, %v841
    %v843 = vsel %vm661, %v638, 0.0
    %v844 = vadd.f32 %v842, %v843
    %v845 = vsel %vm661, %v643, 0.0
    %v846 = vadd.f32 %v844, %v845
    %v847 = vsel %vm661, %v648, 0.0
    %v848 = vadd.f32 %v846, %v847
    %v849 = vsel %vm661, %v653, 0.0
    %v850 = vadd.f32 %v848, %v849
    %v851 = vsel %vm661, %v658, 0.0
    %v852 = vadd.f32 %v850, %v851
    %v853 = vrot.slane %v852, 4
    %v854 = vadd.f32 %v852, %v853
    %v855 = vrot.slane %v854, 2
    %v856 = vadd.f32 %v854, %v855
    %v857 = vrot.slane %v856, 1
    %v858 = vadd.f32 %v856, %v857
    %v859 = vmul.f32 %v343, %v343
    %v860 = vmul.f32 %v348, %v348
    %v861 = vmul.f32 %v353, %v353
    %v862 = vmul.f32 %v358, %v358
    %v863 = vmul.f32 %v363, %v363
    %v864 = vmul.f32 %v368, %v368
    %v865 = vmul.f32 %v373, %v373
    %v866 = vmul.f32 %v378, %v378
    %v867 = vmul.f32 %v383, %v383
    %v868 = vmul.f32 %v388, %v388
    %v869 = vmul.f32 %v393, %v393
    %v870 = vmul.f32 %v398, %v398
    %v871 = vmul.f32 %v403, %v403
    %v872 = vmul.f32 %v408, %v408
    %v873 = vmul.f32 %v413, %v413
    %v874 = vmul.f32 %v418, %v418
    %v875 = vmul.f32 %v423, %v423
    %v876 = vmul.f32 %v428, %v428
    %v877 = vmul.f32 %v433, %v433
    %v878 = vmul.f32 %v438, %v438
    %v879 = vmul.f32 %v443, %v443
    %v880 = vmul.f32 %v448, %v448
    %v881 = vmul.f32 %v453, %v453
    %v882 = vmul.f32 %v458, %v458
    %v883 = vmul.f32 %v463, %v463
    %v884 = vmul.f32 %v468, %v468
    %v885 = vmul.f32 %v473, %v473
    %v886 = vmul.f32 %v478, %v478
    %v887 = vmul.f32 %v483, %v483
    %v888 = vmul.f32 %v488, %v488
    %v889 = vmul.f32 %v493, %v493
    %v890 = vmul.f32 %v498, %v498
    %v891 = vmul.f32 %v503, %v503
    %v892 = vmul.f32 %v508, %v508
    %v893 = vmul.f32 %v513, %v513
    %v894 = vmul.f32 %v518, %v518
    %v895 = vmul.f32 %v523, %v523
    %v896 = vmul.f32 %v528, %v528
    %v897 = vmul.f32 %v533, %v533
    %v898 = vmul.f32 %v538, %v538
    %v899 = vmul.f32 %v543, %v543
    %v900 = vmul.f32 %v548, %v548
    %v901 = vmul.f32 %v553, %v553
    %v902 = vmul.f32 %v558, %v558
    %v903 = vmul.f32 %v563, %v563
    %v904 = vmul.f32 %v568, %v568
    %v905 = vmul.f32 %v573, %v573
    %v906 = vmul.f32 %v578, %v578
    %v907 = vmul.f32 %v583, %v583
    %v908 = vmul.f32 %v588, %v588
    %v909 = vmul.f32 %v593, %v593
    %v910 = vmul.f32 %v598, %v598
    %v911 = vmul.f32 %v603, %v603
    %v912 = vmul.f32 %v608, %v608
    %v913 = vmul.f32 %v613, %v613
    %v914 = vmul.f32 %v618, %v618
    %v915 = vmul.f32 %v623, %v623
    %v916 = vmul.f32 %v628, %v628
    %v917 = vmul.f32 %v633, %v633
    %v918 = vmul.f32 %v638, %v638
    %v919 = vmul.f32 %v643, %v643
    %v920 = vmul.f32 %v648, %v648
    %v921 = vmul.f32 %v653, %v653
    %v922 = vmul.f32 %v658, %v658
    %v923 = vsel %vm661, %v859, 0.0
    %v924 = vsel %vm661, %v860, 0.0
    %v925 = vadd.f32 %v923, %v924
    %v926 = vsel %vm661, %v861, 0.0
    %v927 = vadd.f32 %v925, %v926
    %v928 = vsel %vm661, %v862, 0.0
    %v929 = vadd.f32 %v927, %v928
    %v930 = vsel %vm661, %v863, 0.0
    %v931 = vadd.f32 %v929, %v930
    %v932 = vsel %vm661, %v864, 0.0
    %v933 = vadd.f32 %v931, %v932
    %v934 = vsel %vm661, %v865, 0.0
    %v935 = vadd.f32 %v933, %v934
    %v936 = vsel %vm661, %v866, 0.0
    %v937 = vadd.f32 %v935, %v936
    %v938 = vsel %vm661, %v867, 0.0
    %v939 = vadd.f32 %v937, %v938
    %v940 = vsel %vm661, %v868, 0.0
    %v941 = vadd.f32 %v939, %v940
    %v942 = vsel %vm661, %v869, 0.0
    %v943 = vadd.f32 %v941, %v942
    %v944 = vsel %vm661, %v870, 0.0
    %v945 = vadd.f32 %v943, %v944
    %v946 = vsel %vm661, %v871, 0.0
    %v947 = vadd.f32 %v945, %v946
    %v948 = vsel %vm661, %v872, 0.0
    %v949 = vadd.f32 %v947, %v948
    %v950 = vsel %vm661, %v873, 0.0
    %v951 = vadd.f32 %v949, %v950
    %v952 = vsel %vm661, %v874, 0.0
    %v953 = vadd.f32 %v951, %v952
    %v954 = vsel %vm661, %v875, 0.0
    %v955 = vadd.f32 %v953, %v954
    %v956 = vsel %vm661, %v876, 0.0
    %v957 = vadd.f32 %v955, %v956
    %v958 = vsel %vm661, %v877, 0.0
    %v959 = vadd.f32 %v957, %v958
    %v960 = vsel %vm661, %v878, 0.0
    %v961 = vadd.f32 %v959, %v960
    %v962 = vsel %vm661, %v879, 0.0
    %v963 = vadd.f32 %v961, %v962
    %v964 = vsel %vm661, %v880, 0.0
    %v965 = vadd.f32 %v963, %v964
    %v966 = vsel %vm661, %v881, 0.0
    %v967 = vadd.f32 %v965, %v966
    %v968 = vsel %vm661, %v882, 0.0
    %v969 = vadd.f32 %v967, %v968
    %v970 = vsel %vm661, %v883, 0.0
    %v971 = vadd.f32 %v969, %v970
    %v972 = vsel %vm661, %v884, 0.0
    %v973 = vadd.f32 %v971, %v972
    %v974 = vsel %vm661, %v885, 0.0
    %v975 = vadd.f32 %v973, %v974
    %v976 = vsel %vm661, %v886, 0.0
    %v977 = vadd.f32 %v975, %v976
    %v978 = vsel %vm661, %v887, 0.0
    %v979 = vadd.f32 %v977, %v978
    %v980 = vsel %vm661, %v888, 0.0
    %v981 = vadd.f32 %v979, %v980
    %v982 = vsel %vm661, %v889, 0.0
    %v983 = vadd.f32 %v981, %v982
    %v984 = vsel %vm661, %v890, 0.0
    %v985 = vadd.f32 %v983, %v984
    %v986 = vsel %vm661, %v891, 0.0
    %v987 = vadd.f32 %v985, %v986
    %v988 = vsel %vm661, %v892, 0.0
    %v989 = vadd.f32 %v987, %v988
    %v990 = vsel %vm661, %v893, 0.0
    %v991 = vadd.f32 %v989, %v990
    %v992 = vsel %vm661, %v894, 0.0
    %v993 = vadd.f32 %v991, %v992
    %v994 = vsel %vm661, %v895, 0.0
    %v995 = vadd.f32 %v993, %v994
    %v996 = vsel %vm661, %v896, 0.0
    %v997 = vadd.f32 %v995, %v996
    %v998 = vsel %vm661, %v897, 0.0
    %v999 = vadd.f32 %v997, %v998
    %v1000 = vsel %vm661, %v898, 0.0
    %v1001 = vadd.f32 %v999, %v1000
    %v1002 = vsel %vm661, %v899, 0.0
    %v1003 = vadd.f32 %v1001, %v1002
    %v1004 = vsel %vm661, %v900, 0.0
    %v1005 = vadd.f32 %v1003, %v1004
    %v1006 = vsel %vm661, %v901, 0.0
    %v1007 = vadd.f32 %v1005, %v1006
    %v1008 = vsel %vm661, %v902, 0.0
    %v1009 = vadd.f32 %v1007, %v1008
    %v1010 = vsel %vm661, %v903, 0.0
    %v1011 = vadd.f32 %v1009, %v1010
    %v1012 = vsel %vm661, %v904, 0.0
    %v1013 = vadd.f32 %v1011, %v1012
    %v1014 = vsel %vm661, %v905, 0.0
    %v1015 = vadd.f32 %v1013, %v1014
    %v1016 = vsel %vm661, %v906, 0.0
    %v1017 = vadd.f32 %v1015, %v1016
    %v1018 = vsel %vm661, %v907, 0.0
    %v1019 = vadd.f32 %v1017, %v1018
    %v1020 = vsel %vm661, %v908, 0.0
    %v1021 = vadd.f32 %v1019, %v1020
    %v1022 = vsel %vm661, %v909, 0.0
    %v1023 = vadd.f32 %v1021, %v1022
    %v1024 = vsel %vm661, %v910, 0.0
    %v1025 = vadd.f32 %v1023, %v1024
    %v1026 = vsel %vm661, %v911, 0.0
    %v1027 = vadd.f32 %v1025, %v1026
    %v1028 = vsel %vm661, %v912, 0.0
    %v1029 = vadd.f32 %v1027, %v1028
    %v1030 = vsel %vm661, %v913, 0.0
    %v1031 = vadd.f32 %v1029, %v1030
    %v1032 = vsel %vm661, %v914, 0.0
    %v1033 = vadd.f32 %v1031, %v1032
    %v1034 = vsel %vm661, %v915, 0.0
    %v1035 = vadd.f32 %v1033, %v1034
    %v1036 = vsel %vm661, %v916, 0.0
    %v1037 = vadd.f32 %v1035, %v1036
    %v1038 = vsel %vm661, %v917, 0.0
    %v1039 = vadd.f32 %v1037, %v1038
    %v1040 = vsel %vm661, %v918, 0.0
    %v1041 = vadd.f32 %v1039, %v1040
    %v1042 = vsel %vm661, %v919, 0.0
    %v1043 = vadd.f32 %v1041, %v1042
    %v1044 = vsel %vm661, %v920, 0.0
    %v1045 = vadd.f32 %v1043, %v1044
    %v1046 = vsel %vm661, %v921, 0.0
    %v1047 = vadd.f32 %v1045, %v1046
    %v1048 = vsel %vm661, %v922, 0.0
    %v1049 = vadd.f32 %v1047, %v1048
    %v1050 = vrot.slane %v1049, 4
    %v1051 = vadd.f32 %v1049, %v1050
    %v1052 = vrot.slane %v1051, 2
    %v1053 = vadd.f32 %v1051, %v1052
    %v1054 = vrot.slane %v1053, 1
    %v1055 = vadd.f32 %v1053, %v1054
    %vm1056 = vcmask 1040384
    %v1057 = vsel %vm1056, %v858, %v1055
    %vm1058 = vcmask 58368
    %1059 = vst.msk [vmem:[#allocation2] sm:$0x3] %vm1058, %v1057
    // Predicated region
    $region10: #{tpu_custom_call.1} parent=1 // pred_check
      _
    $region11: #{tpu_custom_call.1} parent=1 // pred_check_branch
      %1061 = sbr.rel (0) target = $region13
    $region12: #{tpu_custom_call.1} parent=1 // pred_region
      _
    $region13: #{tpu_custom_call.1} parent=1 // pred_fallthru
      _
    // Predicated region
    $region14: #{tpu_custom_call.1} parent=1 // pred_check
      _
    $region15: #{tpu_custom_call.1} parent=1 // pred_check_branch
      %1063 = sbr.rel (0) target = $region17
    $region16: #{tpu_custom_call.1} parent=1 // pred_region
      %s1065 = ssub.s32 32, 32
      %1066 = vsyncadd [#allocation3], %s1065
      %s1068 = sshll.u32 [#allocation2], 4
      %s1069 = int_to_ptr.vmem [resolvable:$true] %s1068
      %1071 = dma.vmem_to_hbm [thread:$0]  %s1069, 32, %s3, [#allocation3]
    $region17: #{tpu_custom_call.1} parent=1 // pred_fallthru
      _
    // Predicated region
    $region18: #{tpu_custom_call.1} parent=1 // pred_check
      _
    $region19: #{tpu_custom_call.1} parent=1 // pred_check_branch
      %1073 = sbr.rel (0) target = $region21
    $region20: #{tpu_custom_call.1} parent=1 // pred_region
      _
    $region21: #{tpu_custom_call.1} parent=1 // pred_fallthru
      _
    // Predicated region
    $region22: #{tpu_custom_call.1} parent=1 // pred_check
      _
    $region23: #{tpu_custom_call.1} parent=1 // pred_check_branch
      %1075 = sbr.rel (0) target = $region25
    $region24: #{tpu_custom_call.1} parent=1 // pred_region
      %1076 = dma.done [#allocation3], 32
    $region25: #{tpu_custom_call.1} parent=1 // pred_fallthru
      _
    %1077 = vsyncpa [#allocation3], 1

</llo_original>
